<compile_context>
chip_gen: v6e
topology: v6e:2x2x1
jax: 0.10.0
libtpu: 0.0.40
codegen_flags: <defaults>
</compile_context>

<pallas_src>
import functools

import jax
import jax.numpy as jnp
from jax import lax
from jax.experimental import pallas as pl
from jax.experimental.pallas import tpu as pltpu


def _lstm_kernel(x_ref, wih_ref, whh_ref, b_ref, wfc_ref, bfc_ref,
                 out_ref, xproj_ref, *, seq_len, batch, unroll):
    """One grid step = full recurrence for one batch chunk.

    x_ref:    (T*Bc, I)   time-major input for this batch chunk
    wih_ref:  (I, 4H)     W_ih^T (g-gate columns pre-scaled by 2), f32
    whh_ref:  (H, 4H)     W_hh^T (g-gate columns pre-scaled by 2), bf16
    b_ref:    (1, 4H)     b_ih + b_hh (g-gate columns pre-scaled by 2), f32
    wfc_ref:  (H, O)      W_fc^T
    bfc_ref:  (1, O)
    out_ref:  (Bc, O)
    xproj_ref:(T*Bc, 4H)  VMEM scratch: hoisted input projections
    """
    H = whh_ref.shape[0]

    # Hoist all T input projections out of the serial recurrence: one MXU matmul.
    xproj_ref[...] = (
        jnp.dot(x_ref[...], wih_ref[...], preferred_element_type=jnp.float32)
        + b_ref[...])

    def step(t, carry):
        h, c = carry
        row = pl.multiple_of(t * batch, 8)               # sublane-aligned slice
        # bf16 x bf16 -> f32 accumulate: single-pass MXU on the serial path.
        gates = (xproj_ref[pl.ds(row, batch), :]
                 + jnp.dot(h.astype(jnp.bfloat16), whh_ref[...],
                           preferred_element_type=jnp.float32))

        # Single full-width transcendental per step (EUP).  The g-gate columns of
        # the weights/bias were pre-scaled by 2, so tanh(z) = 2*sigmoid(2z) - 1.
        sig = jax.nn.sigmoid(gates)                      # (Bc, 4H)
        i_g = sig[:, 0 * H:1 * H]
        f_g = sig[:, 1 * H:2 * H]
        g_g = 2.0 * sig[:, 2 * H:3 * H] - 1.0            # == tanh of unscaled gate
        o_g = sig[:, 3 * H:4 * H]

        c_new = f_g * c + i_g * g_g
        h_new = o_g * jnp.tanh(c_new)
        return h_new, c_new

    h0 = jnp.zeros((batch, H), jnp.float32)
    c0 = jnp.zeros((batch, H), jnp.float32)
    h_last, _ = lax.fori_loop(0, seq_len, step, (h0, c0), unroll=unroll)

    out_ref[...] = (
        jnp.dot(h_last, wfc_ref[...], preferred_element_type=jnp.float32)
        + bfc_ref[...])


def lstm_net_forward(x, w_ih, w_hh, b_ih, b_hh, w_fc, b_fc):
    """x: (B, T, I) float32 (PyTorch batch_first). Returns (B, O) float32."""
    B, T, I = x.shape
    H4 = w_ih.shape[0]
    H = H4 // 4
    O = w_fc.shape[0]

    # Pad batch to full sublane tiles; split into sublane-group chunks for the
    # (v7x-parallel) batch grid axis.
    B_pad = max(8, ((B + 7) // 8) * 8)
    Bc = 8                                                       # one sublane group
    n_chunks = B_pad // Bc

    # Time-major, batch-padded, chunked layout: (n_chunks, T*Bc, I).
    x_tm = jnp.transpose(x, (1, 0, 2)).astype(jnp.float32)       # (T, B, I)
    if B_pad != B:
        x_tm = jnp.pad(x_tm, ((0, 0), (0, B_pad - B), (0, 0)))
    x_ck = (x_tm.reshape(T, n_chunks, Bc, I)
            .transpose(1, 0, 2, 3)
            .reshape(n_chunks, T * Bc, I))

    wih_t = jnp.transpose(w_ih).astype(jnp.float32)              # (I, 4H)
    whh_t = jnp.transpose(w_hh).astype(jnp.float32)              # (H, 4H)
    bias = (b_ih + b_hh).reshape(1, 4 * H).astype(jnp.float32)   # (1, 4H)
    wfc_t = jnp.transpose(w_fc).astype(jnp.float32)              # (H, O)
    bfc = b_fc.reshape(1, O).astype(jnp.float32)                 # (1, O)

    # Pre-scale the g-gate columns by 2 so the kernel can recover tanh from sigmoid.
    def _scale_g(a):
        return a.at[:, 2 * H:3 * H].multiply(2.0)

    wih_t = _scale_g(wih_t)
    whh_t = _scale_g(whh_t).astype(jnp.bfloat16)                 # bf16 recurrent weight
    bias = _scale_g(bias)

    grid_spec = pltpu.PrefetchScalarGridSpec(
        num_scalar_prefetch=0,
        grid=(n_chunks,),                                        # independent batch chunks
        in_specs=[
            pl.BlockSpec((pl.Squeezed(), T * Bc, I), lambda b: (b, 0, 0)),  # x chunk
            pl.BlockSpec((I, 4 * H), lambda b: (0, 0)),          # W_ih^T
            pl.BlockSpec((H, 4 * H), lambda b: (0, 0)),          # W_hh^T (bf16)
            pl.BlockSpec((1, 4 * H), lambda b: (0, 0)),          # bias
            pl.BlockSpec((H, O), lambda b: (0, 0)),              # W_fc^T
            pl.BlockSpec((1, O), lambda b: (0, 0)),              # b_fc
        ],
        out_specs=pl.BlockSpec((Bc, O), lambda b: (b, 0)),
        scratch_shapes=[
            pltpu.VMEM((T * Bc, 4 * H), jnp.float32),            # hoisted x-projections
        ],
    )

    out_pad = pl.pallas_call(
        functools.partial(_lstm_kernel, seq_len=T, batch=Bc,
                          unroll=min(8, T)),
        out_shape=jax.ShapeDtypeStruct((B_pad, O), jnp.float32),
        grid_spec=grid_spec,
        compiler_params=pltpu.CompilerParams(
            dimension_semantics=("parallel",),                   # megacore on v7x
            vmem_limit_bytes=32 * 1024 * 1024,                   # headroom on v5e default
        ),
    )(x_ck, wih_t, whh_t, bias, wfc_t, bfc)

    return out_pad[:B]                                           # drop padded rows


def _reference_forward(x, w_ih, w_hh, b_ih, b_hh, w_fc, b_fc):
    """Pure-JAX reference matching torch.nn.LSTM + Linear semantics (all f32)."""
    B, T, I = x.shape
    H = w_hh.shape[1]

    def step(carry, x_t):
        h, c = carry
        gates = x_t @ w_ih.T + b_ih + h @ w_hh.T + b_hh
        i_g = jax.nn.sigmoid(gates[:, 0 * H:1 * H])
        f_g = jax.nn.sigmoid(gates[:, 1 * H:2 * H])
        g_g = jnp.tanh(gates[:, 2 * H:3 * H])
        o_g = jax.nn.sigmoid(gates[:, 3 * H:4 * H])
        c = f_g * c + i_g * g_g
        h = o_g * jnp.tanh(c)
        return (h, c), None

    h0 = jnp.zeros((B, H), jnp.float32)
    c0 = jnp.zeros((B, H), jnp.float32)
    (h_last, _), _ = lax.scan(step, (h0, c0), jnp.transpose(x, (1, 0, 2)))
    return h_last @ w_fc.T + b_fc


if __name__ == "__main__":
    # Small shapes consistent with the module's forward.
    B, T, I, H, O = 2, 8, 4, 32, 8

    key = jax.random.PRNGKey(0)
    ks = jax.random.split(key, 7)
    scale = 1.0 / jnp.sqrt(H)
    w_ih = jax.random.uniform(ks[0], (4 * H, I), jnp.float32, -scale, scale)
    w_hh = jax.random.uniform(ks[1], (4 * H, H), jnp.float32, -scale, scale)
    b_ih = jax.random.uniform(ks[2], (4 * H,), jnp.float32, -scale, scale)
    b_hh = jax.random.uniform(ks[3], (4 * H,), jnp.float32, -scale, scale)
    w_fc = jax.random.uniform(ks[4], (O, H), jnp.float32, -scale, scale)
    b_fc = jax.random.uniform(ks[5], (O,), jnp.float32, -scale, scale)
    x = jax.random.normal(ks[6], (B, T, I), jnp.float32)

    out = lstm_net_forward(x, w_ih, w_hh, b_ih, b_hh, w_fc, b_fc)
    out = jax.block_until_ready(out)

    ref = _reference_forward(x, w_ih, w_hh, b_ih, b_hh, w_fc, b_fc)
    assert out.shape == (B, O)
    # Tolerance relaxed (vs 1e-4) for the bf16 h @ W_hh recurrent matmul;
    # accumulation stays f32 so drift over T steps is small.
    assert jnp.allclose(out, ref, atol=2e-2, rtol=2e-2), "mismatch vs reference"

    print("KERNEL_OK")
</pallas_src>

<mosaic_0001>
module attributes {stable_mosaic.version = 11 : i64} {
  func.func @_lstm_kernel(%arg0: i32, %arg1: memref<1x64x4xf32, #tpu.memory_space<vmem>>, %arg2: memref<4x128xf32, #tpu.memory_space<vmem>>, %arg3: memref<32x128xbf16, #tpu.memory_space<vmem>>, %arg4: memref<1x128xf32, #tpu.memory_space<vmem>>, %arg5: memref<32x8xf32, #tpu.memory_space<vmem>>, %arg6: memref<1x8xf32, #tpu.memory_space<vmem>>, %arg7: memref<8x8xf32, #tpu.memory_space<vmem>>, %arg8: memref<64x128xf32, #tpu.memory_space<vmem>>) attributes {dimension_semantics = [#tpu.dimension_semantics<parallel>], iteration_bounds = array<i64: 1>, scalar_prefetch = 0 : i64, scratch_operands = 1 : i64, tpu.core_type = #tpu.core_type<tc>, window_params = [{transform_indices = @transform_0, window_bounds = array<i64: 1, 64, 4>}, {pipeline_mode = #tpu.pipeline_mode<synchronous>, transform_indices = @transform_1, window_bounds = array<i64: 4, 128>}, {pipeline_mode = #tpu.pipeline_mode<synchronous>, transform_indices = @transform_2, window_bounds = array<i64: 32, 128>}, {pipeline_mode = #tpu.pipeline_mode<synchronous>, transform_indices = @transform_3, window_bounds = array<i64: 1, 128>}, {pipeline_mode = #tpu.pipeline_mode<synchronous>, transform_indices = @transform_4, window_bounds = array<i64: 32, 8>}, {pipeline_mode = #tpu.pipeline_mode<synchronous>, transform_indices = @transform_5, window_bounds = array<i64: 1, 8>}, {transform_indices = @transform_6, window_bounds = array<i64: 8, 8>}]} {
    %c0 = arith.constant 0 : index
    %c0_0 = arith.constant 0 : index
    %c0_1 = arith.constant 0 : index
    %0 = vector.load %arg1[%c0, %c0_0, %c0_1] : memref<1x64x4xf32, #tpu.memory_space<vmem>>, vector<1x64x4xf32>
    %1 = vector.shape_cast %0 : vector<1x64x4xf32> to vector<64x4xf32>
    %c0_2 = arith.constant 0 : index
    %c0_3 = arith.constant 0 : index
    %2 = vector.load %arg2[%c0_2, %c0_3] : memref<4x128xf32, #tpu.memory_space<vmem>>, vector<4x128xf32>
    %cst = arith.constant dense<0.000000e+00> : vector<64x128xf32>
    %3 = tpu.matmul %1, %2, %cst {dimension_numbers = #tpu.dot_dimension_numbers<[1], [0], [0], [1], [0, 0, 1, 1], [], []>} : vector<64x4xf32>, vector<4x128xf32>, vector<64x128xf32> -> vector<64x128xf32>
    %c0_4 = arith.constant 0 : index
    %c0_5 = arith.constant 0 : index
    %4 = vector.load %arg4[%c0_4, %c0_5] : memref<1x128xf32, #tpu.memory_space<vmem>>, vector<1x128xf32>
    %5 = vector.broadcast %4 : vector<1x128xf32> to vector<64x128xf32>
    %6 = arith.addf %3, %5 : vector<64x128xf32>
    %c0_6 = arith.constant 0 : index
    %c0_7 = arith.constant 0 : index
    %7 = vector.load %arg8[%c0_6, %c0_7] : memref<64x128xf32, #tpu.memory_space<vmem>>, vector<64x128xf32>
    tpu.vector_store %arg8[%c0_6, %c0_7], %6 {strides = array<i32>} : memref<64x128xf32, #tpu.memory_space<vmem>>, vector<64x128xf32>,
    %cst_8 = arith.constant 0.000000e+00 : f32
    %8 = vector.broadcast %cst_8 : f32 to vector<8x32xf32>
    %cst_9 = arith.constant 0.000000e+00 : f32
    %9 = vector.broadcast %cst_9 : f32 to vector<8x32xf32>
    %c0_i32 = arith.constant 0 : i32
    %c8_i32 = arith.constant 8 : i32
    %10 = arith.muli %c0_i32, %c8_i32 : i32
    %11 = tpu.assume_multiple %10, 8 : i32
    %12 = arith.index_cast %11 : i32 to index
    %c0_10 = arith.constant 0 : index
    %13 = vector.load %arg8[%12, %c0_10] : memref<64x128xf32, #tpu.memory_space<vmem>>, vector<8x128xf32>
    %14 = arith.truncf %8 : vector<8x32xf32> to vector<8x32xbf16>
    %c0_11 = arith.constant 0 : index
    %c0_12 = arith.constant 0 : index
    %15 = vector.load %arg3[%c0_11, %c0_12] : memref<32x128xbf16, #tpu.memory_space<vmem>>, vector<32x128xbf16>
    %cst_13 = arith.constant dense<0.000000e+00> : vector<8x128xf32>
    %16 = tpu.matmul %14, %15, %cst_13 {dimension_numbers = #tpu.dot_dimension_numbers<[1], [0], [0], [1], [0, 0, 1, 1], [], []>} : vector<8x32xbf16>, vector<32x128xbf16>, vector<8x128xf32> -> vector<8x128xf32>
    %17 = arith.addf %13, %16 : vector<8x128xf32>
    %18 = arith.negf %17 : vector<8x128xf32>
    %19 = math.exp %18 : vector<8x128xf32>
    %cst_14 = arith.constant 1.000000e+00 : f32
    %20 = vector.broadcast %cst_14 : f32 to vector<8x128xf32>
    %21 = arith.addf %20, %19 : vector<8x128xf32>
    %22 = arith.divf %20, %21 : vector<8x128xf32>
    %23 = vector.extract_strided_slice %22 {offsets = [0, 0], sizes = [8, 32], strides = [1, 1]} : vector<8x128xf32> to vector<8x32xf32>
    %24 = vector.extract_strided_slice %22 {offsets = [0, 32], sizes = [8, 32], strides = [1, 1]} : vector<8x128xf32> to vector<8x32xf32>
    %25 = vector.extract_strided_slice %22 {offsets = [0, 64], sizes = [8, 32], strides = [1, 1]} : vector<8x128xf32> to vector<8x32xf32>
    %cst_15 = arith.constant 2.000000e+00 : f32
    %26 = vector.broadcast %cst_15 : f32 to vector<8x32xf32>
    %27 = arith.mulf %26, %25 : vector<8x32xf32>
    %cst_16 = arith.constant 1.000000e+00 : f32
    %28 = vector.broadcast %cst_16 : f32 to vector<8x32xf32>
    %29 = arith.subf %27, %28 : vector<8x32xf32>
    %30 = vector.extract_strided_slice %22 {offsets = [0, 96], sizes = [8, 32], strides = [1, 1]} : vector<8x128xf32> to vector<8x32xf32>
    %31 = arith.mulf %24, %9 : vector<8x32xf32>
    %32 = arith.mulf %23, %29 : vector<8x32xf32>
    %33 = arith.addf %31, %32 : vector<8x32xf32>
    %34 = math.tanh %33 : vector<8x32xf32>
    %35 = arith.mulf %30, %34 : vector<8x32xf32>
    %c1_i32 = arith.constant 1 : i32
    %c8_i32_17 = arith.constant 8 : i32
    %36 = arith.muli %c1_i32, %c8_i32_17 : i32
    %37 = tpu.assume_multiple %36, 8 : i32
    %38 = arith.index_cast %37 : i32 to index
    %c0_18 = arith.constant 0 : index
    %39 = vector.load %arg8[%38, %c0_18] : memref<64x128xf32, #tpu.memory_space<vmem>>, vector<8x128xf32>
    %40 = arith.truncf %35 : vector<8x32xf32> to vector<8x32xbf16>
    %c0_19 = arith.constant 0 : index
    %c0_20 = arith.constant 0 : index
    %41 = vector.load %arg3[%c0_19, %c0_20] : memref<32x128xbf16, #tpu.memory_space<vmem>>, vector<32x128xbf16>
    %cst_21 = arith.constant dense<0.000000e+00> : vector<8x128xf32>
    %42 = tpu.matmul %40, %41, %cst_21 {dimension_numbers = #tpu.dot_dimension_numbers<[1], [0], [0], [1], [0, 0, 1, 1], [], []>} : vector<8x32xbf16>, vector<32x128xbf16>, vector<8x128xf32> -> vector<8x128xf32>
    %43 = arith.addf %39, %42 : vector<8x128xf32>
    %44 = arith.negf %43 : vector<8x128xf32>
    %45 = math.exp %44 : vector<8x128xf32>
    %cst_22 = arith.constant 1.000000e+00 : f32
    %46 = vector.broadcast %cst_22 : f32 to vector<8x128xf32>
    %47 = arith.addf %46, %45 : vector<8x128xf32>
    %48 = arith.divf %46, %47 : vector<8x128xf32>
    %49 = vector.extract_strided_slice %48 {offsets = [0, 0], sizes = [8, 32], strides = [1, 1]} : vector<8x128xf32> to vector<8x32xf32>
    %50 = vector.extract_strided_slice %48 {offsets = [0, 32], sizes = [8, 32], strides = [1, 1]} : vector<8x128xf32> to vector<8x32xf32>
    %51 = vector.extract_strided_slice %48 {offsets = [0, 64], sizes = [8, 32], strides = [1, 1]} : vector<8x128xf32> to vector<8x32xf32>
    %cst_23 = arith.constant 2.000000e+00 : f32
    %52 = vector.broadcast %cst_23 : f32 to vector<8x32xf32>
    %53 = arith.mulf %52, %51 : vector<8x32xf32>
    %cst_24 = arith.constant 1.000000e+00 : f32
    %54 = vector.broadcast %cst_24 : f32 to vector<8x32xf32>
    %55 = arith.subf %53, %54 : vector<8x32xf32>
    %56 = vector.extract_strided_slice %48 {offsets = [0, 96], sizes = [8, 32], strides = [1, 1]} : vector<8x128xf32> to vector<8x32xf32>
    %57 = arith.mulf %50, %33 : vector<8x32xf32>
    %58 = arith.mulf %49, %55 : vector<8x32xf32>
    %59 = arith.addf %57, %58 : vector<8x32xf32>
    %60 = math.tanh %59 : vector<8x32xf32>
    %61 = arith.mulf %56, %60 : vector<8x32xf32>
    %c2_i32 = arith.constant 2 : i32
    %c8_i32_25 = arith.constant 8 : i32
    %62 = arith.muli %c2_i32, %c8_i32_25 : i32
    %63 = tpu.assume_multiple %62, 8 : i32
    %64 = arith.index_cast %63 : i32 to index
    %c0_26 = arith.constant 0 : index
    %65 = vector.load %arg8[%64, %c0_26] : memref<64x128xf32, #tpu.memory_space<vmem>>, vector<8x128xf32>
    %66 = arith.truncf %61 : vector<8x32xf32> to vector<8x32xbf16>
    %c0_27 = arith.constant 0 : index
    %c0_28 = arith.constant 0 : index
    %67 = vector.load %arg3[%c0_27, %c0_28] : memref<32x128xbf16, #tpu.memory_space<vmem>>, vector<32x128xbf16>
    %cst_29 = arith.constant dense<0.000000e+00> : vector<8x128xf32>
    %68 = tpu.matmul %66, %67, %cst_29 {dimension_numbers = #tpu.dot_dimension_numbers<[1], [0], [0], [1], [0, 0, 1, 1], [], []>} : vector<8x32xbf16>, vector<32x128xbf16>, vector<8x128xf32> -> vector<8x128xf32>
    %69 = arith.addf %65, %68 : vector<8x128xf32>
    %70 = arith.negf %69 : vector<8x128xf32>
    %71 = math.exp %70 : vector<8x128xf32>
    %cst_30 = arith.constant 1.000000e+00 : f32
    %72 = vector.broadcast %cst_30 : f32 to vector<8x128xf32>
    %73 = arith.addf %72, %71 : vector<8x128xf32>
    %74 = arith.divf %72, %73 : vector<8x128xf32>
    %75 = vector.extract_strided_slice %74 {offsets = [0, 0], sizes = [8, 32], strides = [1, 1]} : vector<8x128xf32> to vector<8x32xf32>
    %76 = vector.extract_strided_slice %74 {offsets = [0, 32], sizes = [8, 32], strides = [1, 1]} : vector<8x128xf32> to vector<8x32xf32>
    %77 = vector.extract_strided_slice %74 {offsets = [0, 64], sizes = [8, 32], strides = [1, 1]} : vector<8x128xf32> to vector<8x32xf32>
    %cst_31 = arith.constant 2.000000e+00 : f32
    %78 = vector.broadcast %cst_31 : f32 to vector<8x32xf32>
    %79 = arith.mulf %78, %77 : vector<8x32xf32>
    %cst_32 = arith.constant 1.000000e+00 : f32
    %80 = vector.broadcast %cst_32 : f32 to vector<8x32xf32>
    %81 = arith.subf %79, %80 : vector<8x32xf32>
    %82 = vector.extract_strided_slice %74 {offsets = [0, 96], sizes = [8, 32], strides = [1, 1]} : vector<8x128xf32> to vector<8x32xf32>
    %83 = arith.mulf %76, %59 : vector<8x32xf32>
    %84 = arith.mulf %75, %81 : vector<8x32xf32>
    %85 = arith.addf %83, %84 : vector<8x32xf32>
    %86 = math.tanh %85 : vector<8x32xf32>
    %87 = arith.mulf %82, %86 : vector<8x32xf32>
    %c3_i32 = arith.constant 3 : i32
    %c8_i32_33 = arith.constant 8 : i32
    %88 = arith.muli %c3_i32, %c8_i32_33 : i32
    %89 = tpu.assume_multiple %88, 8 : i32
    %90 = arith.index_cast %89 : i32 to index
    %c0_34 = arith.constant 0 : index
    %91 = vector.load %arg8[%90, %c0_34] : memref<64x128xf32, #tpu.memory_space<vmem>>, vector<8x128xf32>
    %92 = arith.truncf %87 : vector<8x32xf32> to vector<8x32xbf16>
    %c0_35 = arith.constant 0 : index
    %c0_36 = arith.constant 0 : index
    %93 = vector.load %arg3[%c0_35, %c0_36] : memref<32x128xbf16, #tpu.memory_space<vmem>>, vector<32x128xbf16>
    %cst_37 = arith.constant dense<0.000000e+00> : vector<8x128xf32>
    %94 = tpu.matmul %92, %93, %cst_37 {dimension_numbers = #tpu.dot_dimension_numbers<[1], [0], [0], [1], [0, 0, 1, 1], [], []>} : vector<8x32xbf16>, vector<32x128xbf16>, vector<8x128xf32> -> vector<8x128xf32>
    %95 = arith.addf %91, %94 : vector<8x128xf32>
    %96 = arith.negf %95 : vector<8x128xf32>
    %97 = math.exp %96 : vector<8x128xf32>
    %cst_38 = arith.constant 1.000000e+00 : f32
    %98 = vector.broadcast %cst_38 : f32 to vector<8x128xf32>
    %99 = arith.addf %98, %97 : vector<8x128xf32>
    %100 = arith.divf %98, %99 : vector<8x128xf32>
    %101 = vector.extract_strided_slice %100 {offsets = [0, 0], sizes = [8, 32], strides = [1, 1]} : vector<8x128xf32> to vector<8x32xf32>
    %102 = vector.extract_strided_slice %100 {offsets = [0, 32], sizes = [8, 32], strides = [1, 1]} : vector<8x128xf32> to vector<8x32xf32>
    %103 = vector.extract_strided_slice %100 {offsets = [0, 64], sizes = [8, 32], strides = [1, 1]} : vector<8x128xf32> to vector<8x32xf32>
    %cst_39 = arith.constant 2.000000e+00 : f32
    %104 = vector.broadcast %cst_39 : f32 to vector<8x32xf32>
    %105 = arith.mulf %104, %103 : vector<8x32xf32>
    %cst_40 = arith.constant 1.000000e+00 : f32
    %106 = vector.broadcast %cst_40 : f32 to vector<8x32xf32>
    %107 = arith.subf %105, %106 : vector<8x32xf32>
    %108 = vector.extract_strided_slice %100 {offsets = [0, 96], sizes = [8, 32], strides = [1, 1]} : vector<8x128xf32> to vector<8x32xf32>
    %109 = arith.mulf %102, %85 : vector<8x32xf32>
    %110 = arith.mulf %101, %107 : vector<8x32xf32>
    %111 = arith.addf %109, %110 : vector<8x32xf32>
    %112 = math.tanh %111 : vector<8x32xf32>
    %113 = arith.mulf %108, %112 : vector<8x32xf32>
    %c4_i32 = arith.constant 4 : i32
    %c8_i32_41 = arith.constant 8 : i32
    %114 = arith.muli %c4_i32, %c8_i32_41 : i32
    %115 = tpu.assume_multiple %114, 8 : i32
    %116 = arith.index_cast %115 : i32 to index
    %c0_42 = arith.constant 0 : index
    %117 = vector.load %arg8[%116, %c0_42] : memref<64x128xf32, #tpu.memory_space<vmem>>, vector<8x128xf32>
    %118 = arith.truncf %113 : vector<8x32xf32> to vector<8x32xbf16>
    %c0_43 = arith.constant 0 : index
    %c0_44 = arith.constant 0 : index
    %119 = vector.load %arg3[%c0_43, %c0_44] : memref<32x128xbf16, #tpu.memory_space<vmem>>, vector<32x128xbf16>
    %cst_45 = arith.constant dense<0.000000e+00> : vector<8x128xf32>
    %120 = tpu.matmul %118, %119, %cst_45 {dimension_numbers = #tpu.dot_dimension_numbers<[1], [0], [0], [1], [0, 0, 1, 1], [], []>} : vector<8x32xbf16>, vector<32x128xbf16>, vector<8x128xf32> -> vector<8x128xf32>
    %121 = arith.addf %117, %120 : vector<8x128xf32>
    %122 = arith.negf %121 : vector<8x128xf32>
    %123 = math.exp %122 : vector<8x128xf32>
    %cst_46 = arith.constant 1.000000e+00 : f32
    %124 = vector.broadcast %cst_46 : f32 to vector<8x128xf32>
    %125 = arith.addf %124, %123 : vector<8x128xf32>
    %126 = arith.divf %124, %125 : vector<8x128xf32>
    %127 = vector.extract_strided_slice %126 {offsets = [0, 0], sizes = [8, 32], strides = [1, 1]} : vector<8x128xf32> to vector<8x32xf32>
    %128 = vector.extract_strided_slice %126 {offsets = [0, 32], sizes = [8, 32], strides = [1, 1]} : vector<8x128xf32> to vector<8x32xf32>
    %129 = vector.extract_strided_slice %126 {offsets = [0, 64], sizes = [8, 32], strides = [1, 1]} : vector<8x128xf32> to vector<8x32xf32>
    %cst_47 = arith.constant 2.000000e+00 : f32
    %130 = vector.broadcast %cst_47 : f32 to vector<8x32xf32>
    %131 = arith.mulf %130, %129 : vector<8x32xf32>
    %cst_48 = arith.constant 1.000000e+00 : f32
    %132 = vector.broadcast %cst_48 : f32 to vector<8x32xf32>
    %133 = arith.subf %131, %132 : vector<8x32xf32>
    %134 = vector.extract_strided_slice %126 {offsets = [0, 96], sizes = [8, 32], strides = [1, 1]} : vector<8x128xf32> to vector<8x32xf32>
    %135 = arith.mulf %128, %111 : vector<8x32xf32>
    %136 = arith.mulf %127, %133 : vector<8x32xf32>
    %137 = arith.addf %135, %136 : vector<8x32xf32>
    %138 = math.tanh %137 : vector<8x32xf32>
    %139 = arith.mulf %134, %138 : vector<8x32xf32>
    %c5_i32 = arith.constant 5 : i32
    %c8_i32_49 = arith.constant 8 : i32
    %140 = arith.muli %c5_i32, %c8_i32_49 : i32
    %141 = tpu.assume_multiple %140, 8 : i32
    %142 = arith.index_cast %141 : i32 to index
    %c0_50 = arith.constant 0 : index
    %143 = vector.load %arg8[%142, %c0_50] : memref<64x128xf32, #tpu.memory_space<vmem>>, vector<8x128xf32>
    %144 = arith.truncf %139 : vector<8x32xf32> to vector<8x32xbf16>
    %c0_51 = arith.constant 0 : index
    %c0_52 = arith.constant 0 : index
    %145 = vector.load %arg3[%c0_51, %c0_52] : memref<32x128xbf16, #tpu.memory_space<vmem>>, vector<32x128xbf16>
    %cst_53 = arith.constant dense<0.000000e+00> : vector<8x128xf32>
    %146 = tpu.matmul %144, %145, %cst_53 {dimension_numbers = #tpu.dot_dimension_numbers<[1], [0], [0], [1], [0, 0, 1, 1], [], []>} : vector<8x32xbf16>, vector<32x128xbf16>, vector<8x128xf32> -> vector<8x128xf32>
    %147 = arith.addf %143, %146 : vector<8x128xf32>
    %148 = arith.negf %147 : vector<8x128xf32>
    %149 = math.exp %148 : vector<8x128xf32>
    %cst_54 = arith.constant 1.000000e+00 : f32
    %150 = vector.broadcast %cst_54 : f32 to vector<8x128xf32>
    %151 = arith.addf %150, %149 : vector<8x128xf32>
    %152 = arith.divf %150, %151 : vector<8x128xf32>
    %153 = vector.extract_strided_slice %152 {offsets = [0, 0], sizes = [8, 32], strides = [1, 1]} : vector<8x128xf32> to vector<8x32xf32>
    %154 = vector.extract_strided_slice %152 {offsets = [0, 32], sizes = [8, 32], strides = [1, 1]} : vector<8x128xf32> to vector<8x32xf32>
    %155 = vector.extract_strided_slice %152 {offsets = [0, 64], sizes = [8, 32], strides = [1, 1]} : vector<8x128xf32> to vector<8x32xf32>
    %cst_55 = arith.constant 2.000000e+00 : f32
    %156 = vector.broadcast %cst_55 : f32 to vector<8x32xf32>
    %157 = arith.mulf %156, %155 : vector<8x32xf32>
    %cst_56 = arith.constant 1.000000e+00 : f32
    %158 = vector.broadcast %cst_56 : f32 to vector<8x32xf32>
    %159 = arith.subf %157, %158 : vector<8x32xf32>
    %160 = vector.extract_strided_slice %152 {offsets = [0, 96], sizes = [8, 32], strides = [1, 1]} : vector<8x128xf32> to vector<8x32xf32>
    %161 = arith.mulf %154, %137 : vector<8x32xf32>
    %162 = arith.mulf %153, %159 : vector<8x32xf32>
    %163 = arith.addf %161, %162 : vector<8x32xf32>
    %164 = math.tanh %163 : vector<8x32xf32>
    %165 = arith.mulf %160, %164 : vector<8x32xf32>
    %c6_i32 = arith.constant 6 : i32
    %c8_i32_57 = arith.constant 8 : i32
    %166 = arith.muli %c6_i32, %c8_i32_57 : i32
    %167 = tpu.assume_multiple %166, 8 : i32
    %168 = arith.index_cast %167 : i32 to index
    %c0_58 = arith.constant 0 : index
    %169 = vector.load %arg8[%168, %c0_58] : memref<64x128xf32, #tpu.memory_space<vmem>>, vector<8x128xf32>
    %170 = arith.truncf %165 : vector<8x32xf32> to vector<8x32xbf16>
    %c0_59 = arith.constant 0 : index
    %c0_60 = arith.constant 0 : index
    %171 = vector.load %arg3[%c0_59, %c0_60] : memref<32x128xbf16, #tpu.memory_space<vmem>>, vector<32x128xbf16>
    %cst_61 = arith.constant dense<0.000000e+00> : vector<8x128xf32>
    %172 = tpu.matmul %170, %171, %cst_61 {dimension_numbers = #tpu.dot_dimension_numbers<[1], [0], [0], [1], [0, 0, 1, 1], [], []>} : vector<8x32xbf16>, vector<32x128xbf16>, vector<8x128xf32> -> vector<8x128xf32>
    %173 = arith.addf %169, %172 : vector<8x128xf32>
    %174 = arith.negf %173 : vector<8x128xf32>
    %175 = math.exp %174 : vector<8x128xf32>
    %cst_62 = arith.constant 1.000000e+00 : f32
    %176 = vector.broadcast %cst_62 : f32 to vector<8x128xf32>
    %177 = arith.addf %176, %175 : vector<8x128xf32>
    %178 = arith.divf %176, %177 : vector<8x128xf32>
    %179 = vector.extract_strided_slice %178 {offsets = [0, 0], sizes = [8, 32], strides = [1, 1]} : vector<8x128xf32> to vector<8x32xf32>
    %180 = vector.extract_strided_slice %178 {offsets = [0, 32], sizes = [8, 32], strides = [1, 1]} : vector<8x128xf32> to vector<8x32xf32>
    %181 = vector.extract_strided_slice %178 {offsets = [0, 64], sizes = [8, 32], strides = [1, 1]} : vector<8x128xf32> to vector<8x32xf32>
    %cst_63 = arith.constant 2.000000e+00 : f32
    %182 = vector.broadcast %cst_63 : f32 to vector<8x32xf32>
    %183 = arith.mulf %182, %181 : vector<8x32xf32>
    %cst_64 = arith.constant 1.000000e+00 : f32
    %184 = vector.broadcast %cst_64 : f32 to vector<8x32xf32>
    %185 = arith.subf %183, %184 : vector<8x32xf32>
    %186 = vector.extract_strided_slice %178 {offsets = [0, 96], sizes = [8, 32], strides = [1, 1]} : vector<8x128xf32> to vector<8x32xf32>
    %187 = arith.mulf %180, %163 : vector<8x32xf32>
    %188 = arith.mulf %179, %185 : vector<8x32xf32>
    %189 = arith.addf %187, %188 : vector<8x32xf32>
    %190 = math.tanh %189 : vector<8x32xf32>
    %191 = arith.mulf %186, %190 : vector<8x32xf32>
    %c7_i32 = arith.constant 7 : i32
    %c8_i32_65 = arith.constant 8 : i32
    %192 = arith.muli %c7_i32, %c8_i32_65 : i32
    %193 = tpu.assume_multiple %192, 8 : i32
    %194 = arith.index_cast %193 : i32 to index
    %c0_66 = arith.constant 0 : index
    %195 = vector.load %arg8[%194, %c0_66] : memref<64x128xf32, #tpu.memory_space<vmem>>, vector<8x128xf32>
    %196 = arith.truncf %191 : vector<8x32xf32> to vector<8x32xbf16>
    %c0_67 = arith.constant 0 : index
    %c0_68 = arith.constant 0 : index
    %197 = vector.load %arg3[%c0_67, %c0_68] : memref<32x128xbf16, #tpu.memory_space<vmem>>, vector<32x128xbf16>
    %cst_69 = arith.constant dense<0.000000e+00> : vector<8x128xf32>
    %198 = tpu.matmul %196, %197, %cst_69 {dimension_numbers = #tpu.dot_dimension_numbers<[1], [0], [0], [1], [0, 0, 1, 1], [], []>} : vector<8x32xbf16>, vector<32x128xbf16>, vector<8x128xf32> -> vector<8x128xf32>
    %199 = arith.addf %195, %198 : vector<8x128xf32>
    %200 = arith.negf %199 : vector<8x128xf32>
    %201 = math.exp %200 : vector<8x128xf32>
    %cst_70 = arith.constant 1.000000e+00 : f32
    %202 = vector.broadcast %cst_70 : f32 to vector<8x128xf32>
    %203 = arith.addf %202, %201 : vector<8x128xf32>
    %204 = arith.divf %202, %203 : vector<8x128xf32>
    %205 = vector.extract_strided_slice %204 {offsets = [0, 0], sizes = [8, 32], strides = [1, 1]} : vector<8x128xf32> to vector<8x32xf32>
    %206 = vector.extract_strided_slice %204 {offsets = [0, 32], sizes = [8, 32], strides = [1, 1]} : vector<8x128xf32> to vector<8x32xf32>
    %207 = vector.extract_strided_slice %204 {offsets = [0, 64], sizes = [8, 32], strides = [1, 1]} : vector<8x128xf32> to vector<8x32xf32>
    %cst_71 = arith.constant 2.000000e+00 : f32
    %208 = vector.broadcast %cst_71 : f32 to vector<8x32xf32>
    %209 = arith.mulf %208, %207 : vector<8x32xf32>
    %cst_72 = arith.constant 1.000000e+00 : f32
    %210 = vector.broadcast %cst_72 : f32 to vector<8x32xf32>
    %211 = arith.subf %209, %210 : vector<8x32xf32>
    %212 = vector.extract_strided_slice %204 {offsets = [0, 96], sizes = [8, 32], strides = [1, 1]} : vector<8x128xf32> to vector<8x32xf32>
    %213 = arith.mulf %206, %189 : vector<8x32xf32>
    %214 = arith.mulf %205, %211 : vector<8x32xf32>
    %215 = arith.addf %213, %214 : vector<8x32xf32>
    %216 = math.tanh %215 : vector<8x32xf32>
    %217 = arith.mulf %212, %216 : vector<8x32xf32>
    %c8_i32_73 = arith.constant 8 : i32
    %c0_74 = arith.constant 0 : index
    %c0_75 = arith.constant 0 : index
    %218 = vector.load %arg5[%c0_74, %c0_75] : memref<32x8xf32, #tpu.memory_space<vmem>>, vector<32x8xf32>
    %cst_76 = arith.constant dense<0.000000e+00> : vector<8x8xf32>
    %219 = tpu.matmul %217, %218, %cst_76 {dimension_numbers = #tpu.dot_dimension_numbers<[1], [0], [0], [1], [0, 0, 1, 1], [], []>} : vector<8x32xf32>, vector<32x8xf32>, vector<8x8xf32> -> vector<8x8xf32>
    %c0_77 = arith.constant 0 : index
    %c0_78 = arith.constant 0 : index
    %220 = vector.load %arg6[%c0_77, %c0_78] : memref<1x8xf32, #tpu.memory_space<vmem>>, vector<1x8xf32>
    %221 = vector.broadcast %220 : vector<1x8xf32> to vector<8x8xf32>
    %222 = arith.addf %219, %221 : vector<8x8xf32>
    %c0_79 = arith.constant 0 : index
    %c0_80 = arith.constant 0 : index
    %223 = vector.load %arg7[%c0_79, %c0_80] : memref<8x8xf32, #tpu.memory_space<vmem>>, vector<8x8xf32>
    tpu.vector_store %arg7[%c0_79, %c0_80], %222 {strides = array<i32>} : memref<8x8xf32, #tpu.memory_space<vmem>>, vector<8x8xf32>,
    return
  }
  func.func @transform_0(%arg0: i32) -> (i32, i32, i32) {
    %c0_i32 = arith.constant 0 : i32
    %c0_i32_0 = arith.constant 0 : i32
    %c0_i32_1 = arith.constant 0 : i32
    return %arg0, %c0_i32, %c0_i32_0 : i32, i32, i32
  }
  func.func @transform_1(%arg0: i32) -> (i32, i32) {
    %c0_i32 = arith.constant 0 : i32
    %c0_i32_0 = arith.constant 0 : i32
    %c0_i32_1 = arith.constant 0 : i32
    return %c0_i32, %c0_i32_0 : i32, i32
  }
  func.func @transform_2(%arg0: i32) -> (i32, i32) {
    %c0_i32 = arith.constant 0 : i32
    %c0_i32_0 = arith.constant 0 : i32
    %c0_i32_1 = arith.constant 0 : i32
    return %c0_i32, %c0_i32_0 : i32, i32
  }
  func.func @transform_3(%arg0: i32) -> (i32, i32) {
    %c0_i32 = arith.constant 0 : i32
    %c0_i32_0 = arith.constant 0 : i32
    %c0_i32_1 = arith.constant 0 : i32
    return %c0_i32, %c0_i32_0 : i32, i32
  }
  func.func @transform_4(%arg0: i32) -> (i32, i32) {
    %c0_i32 = arith.constant 0 : i32
    %c0_i32_0 = arith.constant 0 : i32
    %c0_i32_1 = arith.constant 0 : i32
    return %c0_i32, %c0_i32_0 : i32, i32
  }
  func.func @transform_5(%arg0: i32) -> (i32, i32) {
    %c0_i32 = arith.constant 0 : i32
    %c0_i32_0 = arith.constant 0 : i32
    %c0_i32_1 = arith.constant 0 : i32
    return %c0_i32, %c0_i32_0 : i32, i32
  }
  func.func @transform_6(%arg0: i32) -> (i32, i32) {
    %c0_i32 = arith.constant 0 : i32
    %c0_i32_0 = arith.constant 0 : i32
    return %arg0, %c0_i32 : i32, i32
  }
}

</mosaic_0001>

<llo_original>
// kernel: tpu_custom_call.1
$region0: #{tpu_custom_call.1}
  #allocation0 [shape = 'u32[]', space=smem, size = 0x4, offset = 0x4, fixed_abs, tag = 'smem constant byte address 0x4 - core index']
  #allocation1 [shape = 'u32[144,128]{1,0:T(1,128)}', space=vmem, size = 0x12000, scoped, tag = 'internal scratch']
  #allocation2 [shape = 'f32[64,128]{1,0:T(8,128)}', space=vmem, size = 0x8000, scoped, tag = 'scratch operand']
  %s0 = inlined_call_operand.vmem [shape: f32[1,64,4], index: 0, kind: input, shape index: {}]
  %s1 = inlined_call_operand.vmem [shape: f32[4,128], index: 1, kind: input, shape index: {}]
  %s2 = inlined_call_operand.vmem [shape: bf16[32,128], index: 2, kind: input, shape index: {}]
  %s3 = inlined_call_operand.vmem [shape: f32[1,128], index: 3, kind: input, shape index: {}]
  %s4 = inlined_call_operand.vmem [shape: f32[32,8], index: 4, kind: input, shape index: {}]
  %s5 = inlined_call_operand.vmem [shape: f32[1,8], index: 5, kind: input, shape index: {}]
  %s6 = inlined_call_operand.hbm [shape: f32[8,8], index: 6, kind: output, shape index: {}]
  %s7 = sld [smem:[#allocation0]]
  $region34: #{tpu_custom_call.1} parent=0
    _
  %s9 = ssub.s32 1, %s7
  %s10 = scalar_select 0, %s9, %s7
  $region1: #{tpu_custom_call.1} parent=0
    #allocation3 [shape = 'u8[4096]{0}', space=vmem, size = 0x1000, scoped, tag = 'output window, operand 0, single buffered']
    #allocation4 [shape = 's32[1]{0}', space=sflag, size = 0x4, scoped, tag = 'scoped memory for tpu_custom_call.1']
    %11 = vsyncpa [#allocation4], 0
    // Predicated region
    $region2: #{tpu_custom_call.1} parent=1 // pred_check
      _
    $region3: #{tpu_custom_call.1} parent=1 // pred_check_branch
      %13 = sbr.rel (0) target = $region5
    $region4: #{tpu_custom_call.1} parent=1 // pred_region
      _
    $region5: #{tpu_custom_call.1} parent=1 // pred_fallthru
      _
    // Predicated region
    $region6: #{tpu_custom_call.1} parent=1 // pred_check
      _
    $region7: #{tpu_custom_call.1} parent=1 // pred_check_branch
      %15 = sbr.rel (0) target = $region9
    $region8: #{tpu_custom_call.1} parent=1 // pred_region
      _
    $region9: #{tpu_custom_call.1} parent=1 // pred_fallthru
      _
    // Predicated region
    $region10: #{tpu_custom_call.1} parent=1 // pred_check
      _
    $region11: #{tpu_custom_call.1} parent=1 // pred_check_branch
      %17 = sbr.rel (0) target = $region13
    $region12: #{tpu_custom_call.1} parent=1 // pred_region
      _
    $region13: #{tpu_custom_call.1} parent=1 // pred_fallthru
      _
    // Predicated region
    $region14: #{tpu_custom_call.1} parent=1 // pred_check
      _
    $region15: #{tpu_custom_call.1} parent=1 // pred_check_branch
      %19 = sbr.rel (0) target = $region17
    $region16: #{tpu_custom_call.1} parent=1 // pred_region
      _
    $region17: #{tpu_custom_call.1} parent=1 // pred_fallthru
      _
    // Predicated region
    $region18: #{tpu_custom_call.1} parent=1 // pred_check
      _
    $region19: #{tpu_custom_call.1} parent=1 // pred_check_branch
      %21 = sbr.rel (0) target = $region21
    $region20: #{tpu_custom_call.1} parent=1 // pred_region
      _
    $region21: #{tpu_custom_call.1} parent=1 // pred_fallthru
      _
    // Predicated region
    $region22: #{tpu_custom_call.1} parent=1 // pred_check
      _
    $region23: #{tpu_custom_call.1} parent=1 // pred_check_branch
      %23 = sbr.rel (0) target = $region25
    $region24: #{tpu_custom_call.1} parent=1 // pred_region
      _
    $region25: #{tpu_custom_call.1} parent=1 // pred_fallthru
      _
    %v25 = vld [vmem:[%s0] sm:$0xff]
    %v26 = vld [vmem:[%s0 + $0x8] sm:$0xff]
    %v27 = vld [vmem:[%s0 + $0x10] sm:$0xff]
    %v28 = vld [vmem:[%s0 + $0x18] sm:$0xff]
    %v29 = vld [vmem:[%s0 + $0x20] sm:$0xff]
    %v30 = vld [vmem:[%s0 + $0x28] sm:$0xff]
    %v31 = vld [vmem:[%s0 + $0x30] sm:$0xff]
    %v32 = vld [vmem:[%s0 + $0x38] sm:$0xff]
    %v33 = vld [vmem:[%s1] sm:$0xf]
    %v34 = vld [vmem:[%s3] sm:$0x1]
    %v36 = vlaneseq
    %v37 = vshrl.u32 %v36, 7
    %v38 = vsub.s32 0, %v37
    %v39 = vrot.slane %v34, %v38
    %vm41 = vcmask 31744
    %v43 = vsel %vm41, %v25, 0
    %v46 = vsel %vm41, %v26, 0
    %v49 = vsel %vm41, %v27, 0
    %v52 = vsel %vm41, %v28, 0
    %v55 = vsel %vm41, %v29, 0
    %v58 = vsel %vm41, %v30, 0
    %v61 = vsel %vm41, %v31, 0
    %v64 = vsel %vm41, %v32, 0
    %vm66 = vcmask 1043456
    %v68 = vsel %vm66, %v33, 0
    %70 = vmatprep.subr.mxu0 0.0
    %71 = vmatpush1.msra.mxu0 0.0
    %72 = vmatprep.subr.mxu0 0.0
    %73 = vmatpush1.msra.mxu0 0.0
    %74 = vmatprep.subr.mxu0 0.0
    %75 = vmatpush1.msra.mxu0 0.0
    %76 = vmatprep.subr.mxu0 0.0
    %77 = vmatpush1.msra.mxu0 0.0
    %78 = vmatprep.subr.mxu0 0.0
    %79 = vmatpush1.msra.mxu0 0.0
    %80 = vmatprep.subr.mxu0 0.0
    %81 = vmatpush1.msra.mxu0 0.0
    %82 = vmatprep.subr.mxu0 0.0
    %83 = vmatpush1.msra.mxu0 0.0
    %84 = vmatprep.subr.mxu0 0.0
    %85 = vmatpush1.msra.mxu0 0.0
    %86 = vmatprep.subr.mxu0 0.0
    %87 = vmatpush1.msra.mxu0 0.0
    %88 = vmatprep.subr.mxu0 0.0
    %89 = vmatpush1.msra.mxu0 0.0
    %90 = vmatprep.subr.mxu0 0.0
    %91 = vmatpush1.msra.mxu0 0.0
    %92 = vmatprep.subr.mxu0 0.0
    %93 = vmatpush1.msra.mxu0 0.0
    %94 = vmatprep.subr.mxu0 0.0
    %95 = vmatpush1.msra.mxu0 0.0
    %96 = vmatprep.subr.mxu0 0.0
    %97 = vmatpush1.msra.mxu0 0.0
    %98 = vmatprep.subr.mxu0 0.0
    %99 = vmatpush1.msra.mxu0 0.0
    %100 = vmatprep.subr.mxu0 0.0
    %101 = vmatpush1.msra.mxu0 %v68
    %102 = vmatprep.subr.mxu0 0.0
    %103 = vmatpush2.msra.mxu0 0.0
    %104 = vmatprep.subr.mxu0 0.0
    %105 = vmatpush2.msra.mxu0 0.0
    %106 = vmatprep.subr.mxu0 0.0
    %107 = vmatpush2.msra.mxu0 0.0
    %108 = vmatprep.subr.mxu0 0.0
    %109 = vmatpush2.msra.mxu0 0.0
    %110 = vmatprep.subr.mxu0 0.0
    %111 = vmatpush2.msra.mxu0 0.0
    %112 = vmatprep.subr.mxu0 0.0
    %113 = vmatpush2.msra.mxu0 0.0
    %114 = vmatprep.subr.mxu0 0.0
    %115 = vmatpush2.msra.mxu0 0.0
    %116 = vmatprep.subr.mxu0 0.0
    %117 = vmatpush2.msra.mxu0 0.0
    %118 = vmatprep.subr.mxu0 0.0
    %119 = vmatpush2.msra.mxu0 0.0
    %120 = vmatprep.subr.mxu0 0.0
    %121 = vmatpush2.msra.mxu0 0.0
    %122 = vmatprep.subr.mxu0 0.0
    %123 = vmatpush2.msra.mxu0 0.0
    %124 = vmatprep.subr.mxu0 0.0
    %125 = vmatpush2.msra.mxu0 0.0
    %126 = vmatprep.subr.mxu0 0.0
    %127 = vmatpush2.msra.mxu0 0.0
    %128 = vmatprep.subr.mxu0 0.0
    %129 = vmatpush2.msra.mxu0 0.0
    %130 = vmatprep.subr.mxu0 0.0
    %131 = vmatpush2.msra.mxu0 0.0
    %132 = vmatprep.subr.mxu0 0.0
    %133 = vmatpush2.msra.mxu0 0.0
    %134 = vmatprep.mubr.f32.mxu0 0.0
    %135 = vmatmul.mubr.f32.gmra.mxu0 %v43
    %v136 = vpop.f32.mrf.mxu0
    %v137 = vadd.f32 %v39, %v136
    %v138 = vpop.f32.mrf.mxu0
    %139 = vmatprep.mubr.f32.mxu0 0.0
    %140 = vmatmul.mubr.f32.gmra.mxu0 %v46
    %v141 = vpop.f32.mrf.mxu0
    %v142 = vadd.f32 %v39, %v141
    %v143 = vpop.f32.mrf.mxu0
    %144 = vmatprep.mubr.f32.mxu0 0.0
    %145 = vmatmul.mubr.f32.gmra.mxu0 %v49
    %v146 = vpop.f32.mrf.mxu0
    %v147 = vadd.f32 %v39, %v146
    %v148 = vpop.f32.mrf.mxu0
    %149 = vmatprep.mubr.f32.mxu0 0.0
    %150 = vmatmul.mubr.f32.gmra.mxu0 %v52
    %v151 = vpop.f32.mrf.mxu0
    %v152 = vadd.f32 %v39, %v151
    %v153 = vpop.f32.mrf.mxu0
    %154 = vmatprep.mubr.f32.mxu0 0.0
    %155 = vmatmul.mubr.f32.gmra.mxu0 %v55
    %v156 = vpop.f32.mrf.mxu0
    %v157 = vadd.f32 %v39, %v156
    %v158 = vpop.f32.mrf.mxu0
    %159 = vmatprep.mubr.f32.mxu0 0.0
    %160 = vmatmul.mubr.f32.gmra.mxu0 %v58
    %v161 = vpop.f32.mrf.mxu0
    %v162 = vadd.f32 %v39, %v161
    %v163 = vpop.f32.mrf.mxu0
    %164 = vmatprep.mubr.f32.mxu0 0.0
    %165 = vmatmul.mubr.f32.gmra.mxu0 %v61
    %v166 = vpop.f32.mrf.mxu0
    %v167 = vadd.f32 %v39, %v166
    %v168 = vpop.f32.mrf.mxu0
    %169 = vmatprep.mubr.f32.mxu0 0.0
    %170 = vmatmul.mubr.f32.gmra.mxu0 %v64
    %v171 = vpop.f32.mrf.mxu0
    %v172 = vadd.f32 %v39, %v171
    %v173 = vpop.f32.mrf.mxu0
    %174 = vdwg.mxu0
    %175 = vst [vmem:[#allocation2] sm:$0xff] %v137
    %176 = vst [vmem:[#allocation2 + $0x8] sm:$0xff] %v142
    %177 = vst [vmem:[#allocation2 + $0x10] sm:$0xff] %v147
    %178 = vst [vmem:[#allocation2 + $0x18] sm:$0xff] %v152
    %179 = vst [vmem:[#allocation2 + $0x20] sm:$0xff] %v157
    %180 = vst [vmem:[#allocation2 + $0x28] sm:$0xff] %v162
    %181 = vst [vmem:[#allocation2 + $0x30] sm:$0xff] %v167
    %182 = vst [vmem:[#allocation2 + $0x38] sm:$0xff] %v172
    %v183 = vld [vmem:[#allocation2] sm:$0xff]
    %v184 = vld [vmem:[%s2] sm:$0xf]
    %v185 = vld [vmem:[%s2 + $0x4] sm:$0xf]
    %v186 = vld [vmem:[%s2 + $0x8] sm:$0xf]
    %v187 = vld [vmem:[%s2 + $0xc] sm:$0xf]
    %v192 = vunpack.c.l.b16 %v184
    %v193 = vunpack.c.l.b16 %v185
    %v194 = vunpack.c.l.b16 %v186
    %v195 = vunpack.c.l.b16 %v187
    %v196 = vpack.c.b16 %v193, %v192
    %v197 = vpack.c.b16 %v195, %v194
    %vm200 = vcmask 261120
    %v202 = vsel %vm200, 0, 0
    %204 = vmatprep.subr.bf16.mxu0 0
    %205 = vmatpush1.bf16.msra.mxu0 0
    %206 = vmatprep.subr.bf16.mxu0 0
    %207 = vmatpush1.bf16.msra.mxu0 0
    %208 = vmatprep.subr.bf16.mxu0 0
    %209 = vmatpush1.bf16.msra.mxu0 0
    %210 = vmatprep.subr.bf16.mxu0 0
    %211 = vmatpush1.bf16.msra.mxu0 0
    %212 = vmatprep.subr.bf16.mxu0 0
    %213 = vmatpush1.bf16.msra.mxu0 0
    %214 = vmatprep.subr.bf16.mxu0 0
    %215 = vmatpush1.bf16.msra.mxu0 0
    %216 = vmatprep.subr.bf16.mxu0 0
    %217 = vmatpush1.bf16.msra.mxu0 %v197
    %218 = vmatprep.subr.bf16.mxu0 0
    %219 = vmatpush1.bf16.msra.mxu0 %v196
    %220 = vmatprep.subr.bf16.mxu0 0
    %221 = vmatpush2.bf16.msra.mxu0 0
    %222 = vmatprep.subr.bf16.mxu0 0
    %223 = vmatpush2.bf16.msra.mxu0 0
    %224 = vmatprep.subr.bf16.mxu0 0
    %225 = vmatpush2.bf16.msra.mxu0 0
    %226 = vmatprep.subr.bf16.mxu0 0
    %227 = vmatpush2.bf16.msra.mxu0 0
    %228 = vmatprep.subr.bf16.mxu0 0
    %229 = vmatpush2.bf16.msra.mxu0 0
    %230 = vmatprep.subr.bf16.mxu0 0
    %231 = vmatpush2.bf16.msra.mxu0 0
    %232 = vmatprep.subr.bf16.mxu0 0
    %233 = vmatpush2.bf16.msra.mxu0 0
    %234 = vmatprep.subr.bf16.mxu0 0
    %235 = vmatpush2.bf16.msra.mxu0 0
    %236 = vmatprep.mubr.bf16.mxu0 0
    %237 = vmatmul.mubr.bf16.gmra.mxu0 %v202
    %v238 = vpop.f32.mrf.mxu0
    %v239 = vadd.f32 0.0, %v238
    %v240 = vpop.f32.mrf.mxu0
    %v241 = vpop.f32.mrf.mxu0
    %v242 = vpop.f32.mrf.mxu0
    %243 = vdwg.mxu0
    %v244 = vadd.f32 %v183, %v239
    %v245 = vxor.u32 %v244, 2147483648
    %v246 = vmul.f32 %v245, 1.442695
    %v247 = vpow.pop %v246
    %v248 = vadd.f32 %v247, 1.0
    %v249 = vrcp.pop %v248
    %v250 = vmul.f32 1.0, %v249
    %v251 = vmul.f32 %v250, 2.0
    %v252 = vsub.f32 %v251, 1.0
    %v253 = vmul.f32 %v250, 0.0
    %255 = vrot.lane.b32.xlu0 %v252, 64
    %v256 = vpop.permute.xlu0 %255
    %v258 = vmul.f32 %v250, %v256
    %260 = vrot.lane.b32.xlu0 %v258, 32
    %v261 = vpop.permute.xlu0 %260
    %v263 = vadd.f32 %v253, %v261
    %v264 = vtanh.pop %v263
    %266 = vrot.lane.b32.xlu0 %v264, 64
    %v267 = vpop.permute.xlu0 %266
    %v269 = vmul.f32 %v250, %v267
    %s270 = scalar_lea.vmem [#allocation2], 8
    %v271 = vld [vmem:[%s270] sm:$0xff]
    %v272 = vpack.c.bf16 %v269, %v269
    %274 = vrot.lane.b32.xlu0 %v272, 32
    %v275 = vpop.permute.xlu0 %274
    %v277 = vsel %vm200, %v275, 0
    %279 = vmatprep.subr.bf16.mxu0 0
    %280 = vmatpush1.bf16.msra.mxu0 0
    %281 = vmatprep.subr.bf16.mxu0 0
    %282 = vmatpush1.bf16.msra.mxu0 0
    %283 = vmatprep.subr.bf16.mxu0 0
    %284 = vmatpush1.bf16.msra.mxu0 0
    %285 = vmatprep.subr.bf16.mxu0 0
    %286 = vmatpush1.bf16.msra.mxu0 0
    %287 = vmatprep.subr.bf16.mxu0 0
    %288 = vmatpush1.bf16.msra.mxu0 0
    %289 = vmatprep.subr.bf16.mxu0 0
    %290 = vmatpush1.bf16.msra.mxu0 0
    %291 = vmatprep.subr.bf16.mxu0 0
    %292 = vmatpush1.bf16.msra.mxu0 %v197
    %293 = vmatprep.subr.bf16.mxu0 0
    %294 = vmatpush1.bf16.msra.mxu0 %v196
    %295 = vmatprep.subr.bf16.mxu0 0
    %296 = vmatpush2.bf16.msra.mxu0 0
    %297 = vmatprep.subr.bf16.mxu0 0
    %298 = vmatpush2.bf16.msra.mxu0 0
    %299 = vmatprep.subr.bf16.mxu0 0
    %300 = vmatpush2.bf16.msra.mxu0 0
    %301 = vmatprep.subr.bf16.mxu0 0
    %302 = vmatpush2.bf16.msra.mxu0 0
    %303 = vmatprep.subr.bf16.mxu0 0
    %304 = vmatpush2.bf16.msra.mxu0 0
    %305 = vmatprep.subr.bf16.mxu0 0
    %306 = vmatpush2.bf16.msra.mxu0 0
    %307 = vmatprep.subr.bf16.mxu0 0
    %308 = vmatpush2.bf16.msra.mxu0 0
    %309 = vmatprep.subr.bf16.mxu0 0
    %310 = vmatpush2.bf16.msra.mxu0 0
    %311 = vmatprep.mubr.bf16.mxu0 0
    %312 = vmatmul.mubr.bf16.gmra.mxu0 %v277
    %v313 = vpop.f32.mrf.mxu0
    %v314 = vadd.f32 0.0, %v313
    %v315 = vpop.f32.mrf.mxu0
    %v316 = vpop.f32.mrf.mxu0
    %v317 = vpop.f32.mrf.mxu0
    %318 = vdwg.mxu0
    %v319 = vadd.f32 %v271, %v314
    %v320 = vxor.u32 %v319, 2147483648
    %v321 = vmul.f32 %v320, 1.442695
    %v322 = vpow.pop %v321
    %v323 = vadd.f32 %v322, 1.0
    %v324 = vrcp.pop %v323
    %v325 = vmul.f32 1.0, %v324
    %v326 = vmul.f32 %v325, 2.0
    %v327 = vsub.f32 %v326, 1.0
    %v328 = vmul.f32 %v325, %v263
    %330 = vrot.lane.b32.xlu0 %v327, 64
    %v331 = vpop.permute.xlu0 %330
    %v333 = vmul.f32 %v325, %v331
    %335 = vrot.lane.b32.xlu0 %v333, 32
    %v336 = vpop.permute.xlu0 %335
    %v338 = vadd.f32 %v328, %v336
    %v339 = vtanh.pop %v338
    %341 = vrot.lane.b32.xlu0 %v339, 64
    %v342 = vpop.permute.xlu0 %341
    %v344 = vmul.f32 %v325, %v342
    %s345 = scalar_lea.vmem [#allocation2], 16
    %v346 = vld [vmem:[%s345] sm:$0xff]
    %v347 = vpack.c.bf16 %v344, %v344
    %349 = vrot.lane.b32.xlu0 %v347, 32
    %v350 = vpop.permute.xlu0 %349
    %v352 = vsel %vm200, %v350, 0
    %354 = vmatprep.subr.bf16.mxu0 0
    %355 = vmatpush1.bf16.msra.mxu0 0
    %356 = vmatprep.subr.bf16.mxu0 0
    %357 = vmatpush1.bf16.msra.mxu0 0
    %358 = vmatprep.subr.bf16.mxu0 0
    %359 = vmatpush1.bf16.msra.mxu0 0
    %360 = vmatprep.subr.bf16.mxu0 0
    %361 = vmatpush1.bf16.msra.mxu0 0
    %362 = vmatprep.subr.bf16.mxu0 0
    %363 = vmatpush1.bf16.msra.mxu0 0
    %364 = vmatprep.subr.bf16.mxu0 0
    %365 = vmatpush1.bf16.msra.mxu0 0
    %366 = vmatprep.subr.bf16.mxu0 0
    %367 = vmatpush1.bf16.msra.mxu0 %v197
    %368 = vmatprep.subr.bf16.mxu0 0
    %369 = vmatpush1.bf16.msra.mxu0 %v196
    %370 = vmatprep.subr.bf16.mxu0 0
    %371 = vmatpush2.bf16.msra.mxu0 0
    %372 = vmatprep.subr.bf16.mxu0 0
    %373 = vmatpush2.bf16.msra.mxu0 0
    %374 = vmatprep.subr.bf16.mxu0 0
    %375 = vmatpush2.bf16.msra.mxu0 0
    %376 = vmatprep.subr.bf16.mxu0 0
    %377 = vmatpush2.bf16.msra.mxu0 0
    %378 = vmatprep.subr.bf16.mxu0 0
    %379 = vmatpush2.bf16.msra.mxu0 0
    %380 = vmatprep.subr.bf16.mxu0 0
    %381 = vmatpush2.bf16.msra.mxu0 0
    %382 = vmatprep.subr.bf16.mxu0 0
    %383 = vmatpush2.bf16.msra.mxu0 0
    %384 = vmatprep.subr.bf16.mxu0 0
    %385 = vmatpush2.bf16.msra.mxu0 0
    %386 = vmatprep.mubr.bf16.mxu0 0
    %387 = vmatmul.mubr.bf16.gmra.mxu0 %v352
    %v388 = vpop.f32.mrf.mxu0
    %v389 = vadd.f32 0.0, %v388
    %v390 = vpop.f32.mrf.mxu0
    %v391 = vpop.f32.mrf.mxu0
    %v392 = vpop.f32.mrf.mxu0
    %393 = vdwg.mxu0
    %v394 = vadd.f32 %v346, %v389
    %v395 = vxor.u32 %v394, 2147483648
    %v396 = vmul.f32 %v395, 1.442695
    %v397 = vpow.pop %v396
    %v398 = vadd.f32 %v397, 1.0
    %v399 = vrcp.pop %v398
    %v400 = vmul.f32 1.0, %v399
    %v401 = vmul.f32 %v400, 2.0
    %v402 = vsub.f32 %v401, 1.0
    %v403 = vmul.f32 %v400, %v338
    %405 = vrot.lane.b32.xlu0 %v402, 64
    %v406 = vpop.permute.xlu0 %405
    %v408 = vmul.f32 %v400, %v406
    %410 = vrot.lane.b32.xlu0 %v408, 32
    %v411 = vpop.permute.xlu0 %410
    %v413 = vadd.f32 %v403, %v411
    %v414 = vtanh.pop %v413
    %416 = vrot.lane.b32.xlu0 %v414, 64
    %v417 = vpop.permute.xlu0 %416
    %v419 = vmul.f32 %v400, %v417
    %s420 = scalar_lea.vmem [#allocation2], 24
    %v421 = vld [vmem:[%s420] sm:$0xff]
    %v422 = vpack.c.bf16 %v419, %v419
    %424 = vrot.lane.b32.xlu0 %v422, 32
    %v425 = vpop.permute.xlu0 %424
    %v427 = vsel %vm200, %v425, 0
    %429 = vmatprep.subr.bf16.mxu0 0
    %430 = vmatpush1.bf16.msra.mxu0 0
    %431 = vmatprep.subr.bf16.mxu0 0
    %432 = vmatpush1.bf16.msra.mxu0 0
    %433 = vmatprep.subr.bf16.mxu0 0
    %434 = vmatpush1.bf16.msra.mxu0 0
    %435 = vmatprep.subr.bf16.mxu0 0
    %436 = vmatpush1.bf16.msra.mxu0 0
    %437 = vmatprep.subr.bf16.mxu0 0
    %438 = vmatpush1.bf16.msra.mxu0 0
    %439 = vmatprep.subr.bf16.mxu0 0
    %440 = vmatpush1.bf16.msra.mxu0 0
    %441 = vmatprep.subr.bf16.mxu0 0
    %442 = vmatpush1.bf16.msra.mxu0 %v197
    %443 = vmatprep.subr.bf16.mxu0 0
    %444 = vmatpush1.bf16.msra.mxu0 %v196
    %445 = vmatprep.subr.bf16.mxu0 0
    %446 = vmatpush2.bf16.msra.mxu0 0
    %447 = vmatprep.subr.bf16.mxu0 0
    %448 = vmatpush2.bf16.msra.mxu0 0
    %449 = vmatprep.subr.bf16.mxu0 0
    %450 = vmatpush2.bf16.msra.mxu0 0
    %451 = vmatprep.subr.bf16.mxu0 0
    %452 = vmatpush2.bf16.msra.mxu0 0
    %453 = vmatprep.subr.bf16.mxu0 0
    %454 = vmatpush2.bf16.msra.mxu0 0
    %455 = vmatprep.subr.bf16.mxu0 0
    %456 = vmatpush2.bf16.msra.mxu0 0
    %457 = vmatprep.subr.bf16.mxu0 0
    %458 = vmatpush2.bf16.msra.mxu0 0
    %459 = vmatprep.subr.bf16.mxu0 0
    %460 = vmatpush2.bf16.msra.mxu0 0
    %461 = vmatprep.mubr.bf16.mxu0 0
    %462 = vmatmul.mubr.bf16.gmra.mxu0 %v427
    %v463 = vpop.f32.mrf.mxu0
    %v464 = vadd.f32 0.0, %v463
    %v465 = vpop.f32.mrf.mxu0
    %v466 = vpop.f32.mrf.mxu0
    %v467 = vpop.f32.mrf.mxu0
    %468 = vdwg.mxu0
    %v469 = vadd.f32 %v421, %v464
    %v470 = vxor.u32 %v469, 2147483648
    %v471 = vmul.f32 %v470, 1.442695
    %v472 = vpow.pop %v471
    %v473 = vadd.f32 %v472, 1.0
    %v474 = vrcp.pop %v473
    %v475 = vmul.f32 1.0, %v474
    %v476 = vmul.f32 %v475, 2.0
    %v477 = vsub.f32 %v476, 1.0
    %v478 = vmul.f32 %v475, %v413
    %480 = vrot.lane.b32.xlu0 %v477, 64
    %v481 = vpop.permute.xlu0 %480
    %v483 = vmul.f32 %v475, %v481
    %485 = vrot.lane.b32.xlu0 %v483, 32
    %v486 = vpop.permute.xlu0 %485
    %v488 = vadd.f32 %v478, %v486
    %v489 = vtanh.pop %v488
    %491 = vrot.lane.b32.xlu0 %v489, 64
    %v492 = vpop.permute.xlu0 %491
    %v494 = vmul.f32 %v475, %v492
    %s495 = scalar_lea.vmem [#allocation2], 32
    %v496 = vld [vmem:[%s495] sm:$0xff]
    %v497 = vpack.c.bf16 %v494, %v494
    %499 = vrot.lane.b32.xlu0 %v497, 32
    %v500 = vpop.permute.xlu0 %499
    %v502 = vsel %vm200, %v500, 0
    %504 = vmatprep.subr.bf16.mxu0 0
    %505 = vmatpush1.bf16.msra.mxu0 0
    %506 = vmatprep.subr.bf16.mxu0 0
    %507 = vmatpush1.bf16.msra.mxu0 0
    %508 = vmatprep.subr.bf16.mxu0 0
    %509 = vmatpush1.bf16.msra.mxu0 0
    %510 = vmatprep.subr.bf16.mxu0 0
    %511 = vmatpush1.bf16.msra.mxu0 0
    %512 = vmatprep.subr.bf16.mxu0 0
    %513 = vmatpush1.bf16.msra.mxu0 0
    %514 = vmatprep.subr.bf16.mxu0 0
    %515 = vmatpush1.bf16.msra.mxu0 0
    %516 = vmatprep.subr.bf16.mxu0 0
    %517 = vmatpush1.bf16.msra.mxu0 %v197
    %518 = vmatprep.subr.bf16.mxu0 0
    %519 = vmatpush1.bf16.msra.mxu0 %v196
    %520 = vmatprep.subr.bf16.mxu0 0
    %521 = vmatpush2.bf16.msra.mxu0 0
    %522 = vmatprep.subr.bf16.mxu0 0
    %523 = vmatpush2.bf16.msra.mxu0 0
    %524 = vmatprep.subr.bf16.mxu0 0
    %525 = vmatpush2.bf16.msra.mxu0 0
    %526 = vmatprep.subr.bf16.mxu0 0
    %527 = vmatpush2.bf16.msra.mxu0 0
    %528 = vmatprep.subr.bf16.mxu0 0
    %529 = vmatpush2.bf16.msra.mxu0 0
    %530 = vmatprep.subr.bf16.mxu0 0
    %531 = vmatpush2.bf16.msra.mxu0 0
    %532 = vmatprep.subr.bf16.mxu0 0
    %533 = vmatpush2.bf16.msra.mxu0 0
    %534 = vmatprep.subr.bf16.mxu0 0
    %535 = vmatpush2.bf16.msra.mxu0 0
    %536 = vmatprep.mubr.bf16.mxu0 0
    %537 = vmatmul.mubr.bf16.gmra.mxu0 %v502
    %v538 = vpop.f32.mrf.mxu0
    %v539 = vadd.f32 0.0, %v538
    %v540 = vpop.f32.mrf.mxu0
    %v541 = vpop.f32.mrf.mxu0
    %v542 = vpop.f32.mrf.mxu0
    %543 = vdwg.mxu0
    %v544 = vadd.f32 %v496, %v539
    %v545 = vxor.u32 %v544, 2147483648
    %v546 = vmul.f32 %v545, 1.442695
    %v547 = vpow.pop %v546
    %v548 = vadd.f32 %v547, 1.0
    %v549 = vrcp.pop %v548
    %v550 = vmul.f32 1.0, %v549
    %v551 = vmul.f32 %v550, 2.0
    %v552 = vsub.f32 %v551, 1.0
    %v553 = vmul.f32 %v550, %v488
    %555 = vrot.lane.b32.xlu0 %v552, 64
    %v556 = vpop.permute.xlu0 %555
    %v558 = vmul.f32 %v550, %v556
    %560 = vrot.lane.b32.xlu0 %v558, 32
    %v561 = vpop.permute.xlu0 %560
    %v563 = vadd.f32 %v553, %v561
    %v564 = vtanh.pop %v563
    %566 = vrot.lane.b32.xlu0 %v564, 64
    %v567 = vpop.permute.xlu0 %566
    %v569 = vmul.f32 %v550, %v567
    %s570 = scalar_lea.vmem [#allocation2], 40
    %v571 = vld [vmem:[%s570] sm:$0xff]
    %v572 = vpack.c.bf16 %v569, %v569
    %574 = vrot.lane.b32.xlu0 %v572, 32
    %v575 = vpop.permute.xlu0 %574
    %v577 = vsel %vm200, %v575, 0
    %579 = vmatprep.subr.bf16.mxu0 0
    %580 = vmatpush1.bf16.msra.mxu0 0
    %581 = vmatprep.subr.bf16.mxu0 0
    %582 = vmatpush1.bf16.msra.mxu0 0
    %583 = vmatprep.subr.bf16.mxu0 0
    %584 = vmatpush1.bf16.msra.mxu0 0
    %585 = vmatprep.subr.bf16.mxu0 0
    %586 = vmatpush1.bf16.msra.mxu0 0
    %587 = vmatprep.subr.bf16.mxu0 0
    %588 = vmatpush1.bf16.msra.mxu0 0
    %589 = vmatprep.subr.bf16.mxu0 0
    %590 = vmatpush1.bf16.msra.mxu0 0
    %591 = vmatprep.subr.bf16.mxu0 0
    %592 = vmatpush1.bf16.msra.mxu0 %v197
    %593 = vmatprep.subr.bf16.mxu0 0
    %594 = vmatpush1.bf16.msra.mxu0 %v196
    %595 = vmatprep.subr.bf16.mxu0 0
    %596 = vmatpush2.bf16.msra.mxu0 0
    %597 = vmatprep.subr.bf16.mxu0 0
    %598 = vmatpush2.bf16.msra.mxu0 0
    %599 = vmatprep.subr.bf16.mxu0 0
    %600 = vmatpush2.bf16.msra.mxu0 0
    %601 = vmatprep.subr.bf16.mxu0 0
    %602 = vmatpush2.bf16.msra.mxu0 0
    %603 = vmatprep.subr.bf16.mxu0 0
    %604 = vmatpush2.bf16.msra.mxu0 0
    %605 = vmatprep.subr.bf16.mxu0 0
    %606 = vmatpush2.bf16.msra.mxu0 0
    %607 = vmatprep.subr.bf16.mxu0 0
    %608 = vmatpush2.bf16.msra.mxu0 0
    %609 = vmatprep.subr.bf16.mxu0 0
    %610 = vmatpush2.bf16.msra.mxu0 0
    %611 = vmatprep.mubr.bf16.mxu0 0
    %612 = vmatmul.mubr.bf16.gmra.mxu0 %v577
    %v613 = vpop.f32.mrf.mxu0
    %v614 = vadd.f32 0.0, %v613
    %v615 = vpop.f32.mrf.mxu0
    %v616 = vpop.f32.mrf.mxu0
    %v617 = vpop.f32.mrf.mxu0
    %618 = vdwg.mxu0
    %v619 = vadd.f32 %v571, %v614
    %v620 = vxor.u32 %v619, 2147483648
    %v621 = vmul.f32 %v620, 1.442695
    %v622 = vpow.pop %v621
    %v623 = vadd.f32 %v622, 1.0
    %v624 = vrcp.pop %v623
    %v625 = vmul.f32 1.0, %v624
    %v626 = vmul.f32 %v625, 2.0
    %v627 = vsub.f32 %v626, 1.0
    %v628 = vmul.f32 %v625, %v563
    %630 = vrot.lane.b32.xlu0 %v627, 64
    %v631 = vpop.permute.xlu0 %630
    %v633 = vmul.f32 %v625, %v631
    %635 = vrot.lane.b32.xlu0 %v633, 32
    %v636 = vpop.permute.xlu0 %635
    %v638 = vadd.f32 %v628, %v636
    %v639 = vtanh.pop %v638
    %641 = vrot.lane.b32.xlu0 %v639, 64
    %v642 = vpop.permute.xlu0 %641
    %v644 = vmul.f32 %v625, %v642
    %s645 = scalar_lea.vmem [#allocation2], 48
    %v646 = vld [vmem:[%s645] sm:$0xff]
    %v647 = vpack.c.bf16 %v644, %v644
    %649 = vrot.lane.b32.xlu0 %v647, 32
    %v650 = vpop.permute.xlu0 %649
    %v652 = vsel %vm200, %v650, 0
    %654 = vmatprep.subr.bf16.mxu0 0
    %655 = vmatpush1.bf16.msra.mxu0 0
    %656 = vmatprep.subr.bf16.mxu0 0
    %657 = vmatpush1.bf16.msra.mxu0 0
    %658 = vmatprep.subr.bf16.mxu0 0
    %659 = vmatpush1.bf16.msra.mxu0 0
    %660 = vmatprep.subr.bf16.mxu0 0
    %661 = vmatpush1.bf16.msra.mxu0 0
    %662 = vmatprep.subr.bf16.mxu0 0
    %663 = vmatpush1.bf16.msra.mxu0 0
    %664 = vmatprep.subr.bf16.mxu0 0
    %665 = vmatpush1.bf16.msra.mxu0 0
    %666 = vmatprep.subr.bf16.mxu0 0
    %667 = vmatpush1.bf16.msra.mxu0 %v197
    %668 = vmatprep.subr.bf16.mxu0 0
    %669 = vmatpush1.bf16.msra.mxu0 %v196
    %670 = vmatprep.subr.bf16.mxu0 0
    %671 = vmatpush2.bf16.msra.mxu0 0
    %672 = vmatprep.subr.bf16.mxu0 0
    %673 = vmatpush2.bf16.msra.mxu0 0
    %674 = vmatprep.subr.bf16.mxu0 0
    %675 = vmatpush2.bf16.msra.mxu0 0
    %676 = vmatprep.subr.bf16.mxu0 0
    %677 = vmatpush2.bf16.msra.mxu0 0
    %678 = vmatprep.subr.bf16.mxu0 0
    %679 = vmatpush2.bf16.msra.mxu0 0
    %680 = vmatprep.subr.bf16.mxu0 0
    %681 = vmatpush2.bf16.msra.mxu0 0
    %682 = vmatprep.subr.bf16.mxu0 0
    %683 = vmatpush2.bf16.msra.mxu0 0
    %684 = vmatprep.subr.bf16.mxu0 0
    %685 = vmatpush2.bf16.msra.mxu0 0
    %686 = vmatprep.mubr.bf16.mxu0 0
    %687 = vmatmul.mubr.bf16.gmra.mxu0 %v652
    %v688 = vpop.f32.mrf.mxu0
    %v689 = vadd.f32 0.0, %v688
    %v690 = vpop.f32.mrf.mxu0
    %v691 = vpop.f32.mrf.mxu0
    %v692 = vpop.f32.mrf.mxu0
    %693 = vdwg.mxu0
    %v694 = vadd.f32 %v646, %v689
    %v695 = vxor.u32 %v694, 2147483648
    %v696 = vmul.f32 %v695, 1.442695
    %v697 = vpow.pop %v696
    %v698 = vadd.f32 %v697, 1.0
    %v699 = vrcp.pop %v698
    %v700 = vmul.f32 1.0, %v699
    %v701 = vmul.f32 %v700, 2.0
    %v702 = vsub.f32 %v701, 1.0
    %v703 = vmul.f32 %v700, %v638
    %705 = vrot.lane.b32.xlu0 %v702, 64
    %v706 = vpop.permute.xlu0 %705
    %v708 = vmul.f32 %v700, %v706
    %710 = vrot.lane.b32.xlu0 %v708, 32
    %v711 = vpop.permute.xlu0 %710
    %v713 = vadd.f32 %v703, %v711
    %v714 = vtanh.pop %v713
    %716 = vrot.lane.b32.xlu0 %v714, 64
    %v717 = vpop.permute.xlu0 %716
    %v719 = vmul.f32 %v700, %v717
    %s720 = scalar_lea.vmem [#allocation2], 56
    %v721 = vld [vmem:[%s720] sm:$0xff]
    %v722 = vpack.c.bf16 %v719, %v719
    %724 = vrot.lane.b32.xlu0 %v722, 32
    %v725 = vpop.permute.xlu0 %724
    %v727 = vsel %vm200, %v725, 0
    %729 = vmatprep.subr.bf16.mxu0 0
    %730 = vmatpush1.bf16.msra.mxu0 0
    %731 = vmatprep.subr.bf16.mxu0 0
    %732 = vmatpush1.bf16.msra.mxu0 0
    %733 = vmatprep.subr.bf16.mxu0 0
    %734 = vmatpush1.bf16.msra.mxu0 0
    %735 = vmatprep.subr.bf16.mxu0 0
    %736 = vmatpush1.bf16.msra.mxu0 0
    %737 = vmatprep.subr.bf16.mxu0 0
    %738 = vmatpush1.bf16.msra.mxu0 0
    %739 = vmatprep.subr.bf16.mxu0 0
    %740 = vmatpush1.bf16.msra.mxu0 0
    %741 = vmatprep.subr.bf16.mxu0 0
    %742 = vmatpush1.bf16.msra.mxu0 %v197
    %743 = vmatprep.subr.bf16.mxu0 0
    %744 = vmatpush1.bf16.msra.mxu0 %v196
    %745 = vmatprep.subr.bf16.mxu0 0
    %746 = vmatpush2.bf16.msra.mxu0 0
    %747 = vmatprep.subr.bf16.mxu0 0
    %748 = vmatpush2.bf16.msra.mxu0 0
    %749 = vmatprep.subr.bf16.mxu0 0
    %750 = vmatpush2.bf16.msra.mxu0 0
    %751 = vmatprep.subr.bf16.mxu0 0
    %752 = vmatpush2.bf16.msra.mxu0 0
    %753 = vmatprep.subr.bf16.mxu0 0
    %754 = vmatpush2.bf16.msra.mxu0 0
    %755 = vmatprep.subr.bf16.mxu0 0
    %756 = vmatpush2.bf16.msra.mxu0 0
    %757 = vmatprep.subr.bf16.mxu0 0
    %758 = vmatpush2.bf16.msra.mxu0 0
    %759 = vmatprep.subr.bf16.mxu0 0
    %760 = vmatpush2.bf16.msra.mxu0 0
    %761 = vmatprep.mubr.bf16.mxu0 0
    %762 = vmatmul.mubr.bf16.gmra.mxu0 %v727
    %v763 = vpop.f32.mrf.mxu0
    %v764 = vadd.f32 0.0, %v763
    %v765 = vpop.f32.mrf.mxu0
    %v766 = vpop.f32.mrf.mxu0
    %v767 = vpop.f32.mrf.mxu0
    %768 = vdwg.mxu0
    %v769 = vadd.f32 %v721, %v764
    %v770 = vxor.u32 %v769, 2147483648
    %v771 = vmul.f32 %v770, 1.442695
    %v772 = vpow.pop %v771
    %v773 = vadd.f32 %v772, 1.0
    %v774 = vrcp.pop %v773
    %v775 = vmul.f32 1.0, %v774
    %v776 = vmul.f32 %v775, 2.0
    %v777 = vsub.f32 %v776, 1.0
    %v778 = vmul.f32 %v775, %v713
    %780 = vrot.lane.b32.xlu0 %v777, 64
    %v781 = vpop.permute.xlu0 %780
    %v783 = vmul.f32 %v775, %v781
    %785 = vrot.lane.b32.xlu0 %v783, 32
    %v786 = vpop.permute.xlu0 %785
    %v788 = vadd.f32 %v778, %v786
    %v789 = vtanh.pop %v788
    %791 = vrot.lane.b32.xlu0 %v789, 64
    %v792 = vpop.permute.xlu0 %791
    %v794 = vmul.f32 %v775, %v792
    %v795 = vld [vmem:[%s4] sm:$0xff]
    %v796 = vld [vmem:[%s4 + $0x8] sm:$0xff]
    %v797 = vld [vmem:[%s4 + $0x10] sm:$0xff]
    %v798 = vld [vmem:[%s4 + $0x18] sm:$0xff]
    %v799 = vld [vmem:[%s5] sm:$0x1]
    %v801 = vlaneseq
    %v802 = vshrl.u32 %v801, 7
    %v803 = vsub.s32 0, %v802
    %v804 = vrot.slane %v799, %v803
    %807 = vrot.lane.b32.xlu0 %v794, 32
    %v808 = vpop.permute.xlu0 %807
    %v809 = vsel %vm200, %v808, 0
    %811 = vmatprep.subr.mxu0 0.0
    %812 = vmatpush1.msra.mxu0 0.0
    %813 = vmatprep.subr.mxu0 0.0
    %814 = vmatpush1.msra.mxu0 0.0
    %815 = vmatprep.subr.mxu0 0.0
    %816 = vmatpush1.msra.mxu0 0.0
    %817 = vmatprep.subr.mxu0 0.0
    %818 = vmatpush1.msra.mxu0 0.0
    %819 = vmatprep.subr.mxu0 0.0
    %820 = vmatpush1.msra.mxu0 0.0
    %821 = vmatprep.subr.mxu0 0.0
    %822 = vmatpush1.msra.mxu0 0.0
    %823 = vmatprep.subr.mxu0 0.0
    %824 = vmatpush1.msra.mxu0 0.0
    %825 = vmatprep.subr.mxu0 0.0
    %826 = vmatpush1.msra.mxu0 0.0
    %827 = vmatprep.subr.mxu0 0.0
    %828 = vmatpush1.msra.mxu0 0.0
    %829 = vmatprep.subr.mxu0 0.0
    %830 = vmatpush1.msra.mxu0 0.0
    %831 = vmatprep.subr.mxu0 0.0
    %832 = vmatpush1.msra.mxu0 0.0
    %833 = vmatprep.subr.mxu0 0.0
    %834 = vmatpush1.msra.mxu0 0.0
    %835 = vmatprep.subr.mxu0 0.0
    %836 = vmatpush1.msra.mxu0 %v798
    %837 = vmatprep.subr.mxu0 0.0
    %838 = vmatpush1.msra.mxu0 %v797
    %839 = vmatprep.subr.mxu0 0.0
    %840 = vmatpush1.msra.mxu0 %v796
    %841 = vmatprep.subr.mxu0 0.0
    %842 = vmatpush1.msra.mxu0 %v795
    %843 = vmatprep.subr.mxu0 0.0
    %844 = vmatpush2.msra.mxu0 0.0
    %845 = vmatprep.subr.mxu0 0.0
    %846 = vmatpush2.msra.mxu0 0.0
    %847 = vmatprep.subr.mxu0 0.0
    %848 = vmatpush2.msra.mxu0 0.0
    %849 = vmatprep.subr.mxu0 0.0
    %850 = vmatpush2.msra.mxu0 0.0
    %851 = vmatprep.subr.mxu0 0.0
    %852 = vmatpush2.msra.mxu0 0.0
    %853 = vmatprep.subr.mxu0 0.0
    %854 = vmatpush2.msra.mxu0 0.0
    %855 = vmatprep.subr.mxu0 0.0
    %856 = vmatpush2.msra.mxu0 0.0
    %857 = vmatprep.subr.mxu0 0.0
    %858 = vmatpush2.msra.mxu0 0.0
    %859 = vmatprep.subr.mxu0 0.0
    %860 = vmatpush2.msra.mxu0 0.0
    %861 = vmatprep.subr.mxu0 0.0
    %862 = vmatpush2.msra.mxu0 0.0
    %863 = vmatprep.subr.mxu0 0.0
    %864 = vmatpush2.msra.mxu0 0.0
    %865 = vmatprep.subr.mxu0 0.0
    %866 = vmatpush2.msra.mxu0 0.0
    %867 = vmatprep.subr.mxu0 0.0
    %868 = vmatpush2.msra.mxu0 0.0
    %869 = vmatprep.subr.mxu0 0.0
    %870 = vmatpush2.msra.mxu0 0.0
    %871 = vmatprep.subr.mxu0 0.0
    %872 = vmatpush2.msra.mxu0 0.0
    %873 = vmatprep.subr.mxu0 0.0
    %874 = vmatpush2.msra.mxu0 0.0
    %875 = vmatprep.mubr.f32.mxu0 0.0
    %876 = vmatmul.mubr.f32.gmra.mxu0 %v809
    %v877 = vpop.f32.mrf.mxu0
    %v878 = vadd.f32 %v804, %v877
    %v879 = vpop.f32.mrf.mxu0
    %880 = vdwg.mxu0
    %vm881 = vcmask 64512
    %882 = vst.msk [vmem:[#allocation3] sm:$0xff] %vm881, %v878
    // Predicated region
    $region26: #{tpu_custom_call.1} parent=1 // pred_check
      _
    $region27: #{tpu_custom_call.1} parent=1 // pred_check_branch
      %884 = sbr.rel (0) target = $region29
    $region28: #{tpu_custom_call.1} parent=1 // pred_region
      %s886 = ssub.s32 128, 128
      %887 = vsyncadd [#allocation4], %s886
      %s889 = sshll.u32 [#allocation3], 4
      %s890 = int_to_ptr.vmem [resolvable:$true] %s889
      %892 = dma.vmem_to_hbm [thread:$0]  %s890, 128, %s6, [#allocation4]
    $region29: #{tpu_custom_call.1} parent=1 // pred_fallthru
      _
    // Predicated region
    $region30: #{tpu_custom_call.1} parent=1 // pred_check
      _
    $region31: #{tpu_custom_call.1} parent=1 // pred_check_branch
      %894 = sbr.rel (0) target = $region33
    $region32: #{tpu_custom_call.1} parent=1 // pred_region
      %895 = dma.done [#allocation4], 128
    $region33: #{tpu_custom_call.1} parent=1 // pred_fallthru
      _
    %896 = vsyncpa [#allocation4], 1

</llo_original>
